<compile_context>
chip_gen: v6e
topology: v6e:2x2x1
jax: 0.10.0
libtpu: 0.0.40
codegen_flags: <defaults>
</compile_context>

<pallas_src>
import functools

import jax
import jax.numpy as jnp
from jax import lax
from jax.experimental import pallas as pl
from jax.experimental.pallas import tpu as pltpu

_EPS = 1e-8          # matches torch.nn.CosineSimilarity default eps
_EPS2 = _EPS * _EPS  # max(sqrt(s), eps) == sqrt(max(s, eps*eps))


def _contrastive_loss_kernel(x1_ref, x2_ref, label_ref, o_ref, *,
                             rows_per_tile, num_rows, mask_tail):
    """One batch tile: (TB, D) x1/x2, (TB, 1) label -> per-tile partial sum.

    The partial sum is broadcast into a (1, 8, 128) output tile (single
    unmasked vst); the wrapper reads element [i, 0, 0] of each tile and
    finishes the mean. No cross-tile state -> grid axis is fully parallel.
    """
    x1 = x1_ref[...]                               # (TB, D), native dtype
    x2 = x2_ref[...]                               # (TB, D), native dtype
    label = label_ref[...].astype(jnp.float32)     # (TB, 1)

    # Elementwise products in the input dtype (halves HBM traffic for bf16);
    # lane reductions / accumulation in f32.
    dot = jnp.sum((x1 * x2).astype(jnp.float32), axis=-1, keepdims=True)   # (TB,1)
    n1sq = jnp.sum((x1 * x1).astype(jnp.float32), axis=-1, keepdims=True)  # (TB,1)
    n2sq = jnp.sum((x2 * x2).astype(jnp.float32), axis=-1, keepdims=True)  # (TB,1)

    # cos = dot / (max(||x1||,eps) * max(||x2||,eps))  via EUP rsqrt.
    cos = (dot * lax.rsqrt(jnp.maximum(n1sq, _EPS2))
               * lax.rsqrt(jnp.maximum(n2sq, _EPS2)))
    acos = jnp.abs(cos)
    per_row = label * (1.0 - acos) + (1.0 - label) * acos                   # (TB,1)

    if mask_tail:
        # Ragged last tile: rows >= num_rows contain unspecified data. Mask the
        # *result* so garbage / NaN from the edge cannot leak into the sum.
        row = (pl.program_id(0) * rows_per_tile
               + lax.broadcasted_iota(jnp.int32, per_row.shape, 0))
        per_row = jnp.where(row < num_rows, per_row, 0.0)

    partial = jnp.sum(per_row)                     # XLU reduce (idle slot)
    o_ref[...] = jnp.broadcast_to(partial, o_ref.shape)


def contrastive_loss(x1, x2, label, *, block_rows=None):
    """x1, x2: [B, D]; label: [B] (0/1). Returns scalar f32 loss (mean)."""
    B, D = x1.shape
    label2d = label.reshape(B, 1).astype(jnp.float32)
    dtype_bytes = jnp.dtype(x1.dtype).itemsize

    # Generation-aware VMEM budget (v5e/v6e: 128 MiB physical, v7x: 64 MiB).
    try:
        vmem_cap = getattr(pltpu.get_tpu_info(), "vmem_capacity_bytes",
                           64 * 1024 * 1024)
    except Exception:
        vmem_cap = 64 * 1024 * 1024                 # conservative fallback
    if vmem_cap >= 96 * 1024 * 1024:                # v5e / v6e
        pipeline_budget = 40 * 1024 * 1024          # total double-buffered tiles
        vmem_limit = 80 * 1024 * 1024
    else:                                           # v7x (64 MiB physical)
        pipeline_budget = 20 * 1024 * 1024
        vmem_limit = 48 * 1024 * 1024

    if block_rows is None:
        # Per-row pipeline bytes: 2 inputs x 2 buffers x D x dtype_bytes, plus
        # the label buffers whose 1-wide minor dim pads to 128 f32 lanes.
        per_row_bytes = 4 * D * dtype_bytes + 2 * 128 * 4
        tb = pipeline_budget // per_row_bytes
    else:
        tb = block_rows

    if tb >= B:
        tb = B                        # single full-array tile (layout-legal, no mask)
    else:
        tb = max(8, (tb // 8) * 8)    # multiple of 8 sublanes

    num_tiles = pl.cdiv(B, tb)
    mask_tail = (B % tb) != 0         # ragged last tile handled in-kernel (no jnp.pad)

    kernel = functools.partial(_contrastive_loss_kernel,
                               rows_per_tile=tb, num_rows=B, mask_tail=mask_tail)

    cost = pl.CostEstimate(
        flops=6 * B * D + 12 * B,
        transcendentals=2 * B,
        bytes_accessed=2 * B * D * dtype_bytes + B * 4 + num_tiles * 8 * 128 * 4,
    )

    partials = pl.pallas_call(
        kernel,
        out_shape=jax.ShapeDtypeStruct((num_tiles, 8, 128), jnp.float32),
        grid=(num_tiles,),
        in_specs=[
            pl.BlockSpec((tb, D), lambda i: (i, 0)),
            pl.BlockSpec((tb, D), lambda i: (i, 0)),
            pl.BlockSpec((tb, 1), lambda i: (i, 0)),
        ],
        out_specs=pl.BlockSpec((1, 8, 128), lambda i: (i, 0, 0)),
        compiler_params=pltpu.CompilerParams(
            # Independent per-tile partial sums -> both v7x TCs stream HBM.
            dimension_semantics=("parallel",),
            vmem_limit_bytes=vmem_limit,
        ),
        cost_estimate=cost,
    )(x1, x2, label2d)

    # Finish the mean outside the kernel (tiny reduction over num_tiles values).
    return jnp.sum(partials[:, 0, 0]) * jnp.float32(1.0 / B)


def _reference_loss(x1, x2, label):
    # Pure-JAX reference mirroring the PyTorch module.
    x1 = x1.astype(jnp.float32)
    x2 = x2.astype(jnp.float32)
    label = label.astype(jnp.float32)
    dot = jnp.sum(x1 * x2, axis=-1)
    n1 = jnp.linalg.norm(x1, axis=-1)
    n2 = jnp.linalg.norm(x2, axis=-1)
    cos = dot / (jnp.maximum(n1, _EPS) * jnp.maximum(n2, _EPS))
    acos = jnp.abs(cos)
    loss = label * (1.0 - acos) + (1.0 - label) * acos
    return jnp.mean(loss)


if __name__ == "__main__":
    key = jax.random.PRNGKey(0)

    # Primary (module-implied) small shape: single-tile path.
    B, D = 8, 32
    k1, k2, k3, k4 = jax.random.split(key, 4)
    x1 = jax.random.normal(k1, (B, D), dtype=jnp.float32)
    x2 = jax.random.normal(k2, (B, D), dtype=jnp.float32)
    label = jax.random.bernoulli(k3, 0.5, (B,)).astype(jnp.float32)

    loss = contrastive_loss(x1, x2, label)
    jax.block_until_ready(loss)
    ref = _reference_loss(x1, x2, label)
    assert jnp.allclose(loss, ref, atol=1e-5, rtol=1e-5), (loss, ref)

    # Multi-tile + ragged-tail path: B=20 with 8-row tiles -> 3 parallel grid
    # steps, last tile masked in-kernel (no jnp.pad HBM copy).
    B2, D2 = 20, 128
    k5, k6, k7 = jax.random.split(k4, 3)
    y1 = jax.random.normal(k5, (B2, D2), dtype=jnp.float32)
    y2 = jax.random.normal(k6, (B2, D2), dtype=jnp.float32)
    lbl2 = jax.random.bernoulli(k7, 0.5, (B2,)).astype(jnp.float32)

    loss2 = contrastive_loss(y1, y2, lbl2, block_rows=8)
    jax.block_until_ready(loss2)
    ref2 = _reference_loss(y1, y2, lbl2)
    assert jnp.allclose(loss2, ref2, atol=1e-5, rtol=1e-5), (loss2, ref2)

    print("KERNEL_OK")
</pallas_src>

<mosaic_0001>
module attributes {stable_mosaic.version = 11 : i64} {
  func.func @_contrastive_loss_kernel(%arg0: i32, %arg1: memref<8x32xf32, #tpu.memory_space<vmem>>, %arg2: memref<8x32xf32, #tpu.memory_space<vmem>>, %arg3: memref<8x1xf32, #tpu.memory_space<vmem>>, %arg4: memref<1x8x128xf32, #tpu.memory_space<vmem>>) attributes {dimension_semantics = [#tpu.dimension_semantics<parallel>], iteration_bounds = array<i64: 1>, scalar_prefetch = 0 : i64, scratch_operands = 0 : i64, tpu.core_type = #tpu.core_type<tc>, window_params = [{transform_indices = @transform_0, window_bounds = array<i64: 8, 32>}, {transform_indices = @transform_1, window_bounds = array<i64: 8, 32>}, {transform_indices = @transform_2, window_bounds = array<i64: 8, 1>}, {transform_indices = @transform_3, window_bounds = array<i64: 1, 8, 128>}]} {
    %c0 = arith.constant 0 : index
    %c0_0 = arith.constant 0 : index
    %0 = vector.load %arg1[%c0, %c0_0] : memref<8x32xf32, #tpu.memory_space<vmem>>, vector<8x32xf32>
    %c0_1 = arith.constant 0 : index
    %c0_2 = arith.constant 0 : index
    %1 = vector.load %arg2[%c0_1, %c0_2] : memref<8x32xf32, #tpu.memory_space<vmem>>, vector<8x32xf32>
    %c0_3 = arith.constant 0 : index
    %c0_4 = arith.constant 0 : index
    %2 = vector.load %arg3[%c0_3, %c0_4] : memref<8x1xf32, #tpu.memory_space<vmem>>, vector<8x1xf32>
    %3 = arith.mulf %0, %1 : vector<8x32xf32>
    %cst = arith.constant dense<0.000000e+00> : vector<8xf32>
    %4 = vector.multi_reduction <add>, %3, %cst [1] : vector<8x32xf32> to vector<8xf32>
    %5 = vector.shape_cast %4 : vector<8xf32> to vector<8x1xf32>
    %6 = arith.mulf %0, %0 : vector<8x32xf32>
    %cst_5 = arith.constant dense<0.000000e+00> : vector<8xf32>
    %7 = vector.multi_reduction <add>, %6, %cst_5 [1] : vector<8x32xf32> to vector<8xf32>
    %8 = vector.shape_cast %7 : vector<8xf32> to vector<8x1xf32>
    %9 = arith.mulf %1, %1 : vector<8x32xf32>
    %cst_6 = arith.constant dense<0.000000e+00> : vector<8xf32>
    %10 = vector.multi_reduction <add>, %9, %cst_6 [1] : vector<8x32xf32> to vector<8xf32>
    %11 = vector.shape_cast %10 : vector<8xf32> to vector<8x1xf32>
    %cst_7 = arith.constant 1.000000e-16 : f32
    %12 = vector.broadcast %cst_7 : f32 to vector<8x1xf32>
    %13 = arith.maximumf %8, %12 : vector<8x1xf32>
    %14 = math.rsqrt %13 : vector<8x1xf32>
    %15 = arith.mulf %5, %14 : vector<8x1xf32>
    %cst_8 = arith.constant 1.000000e-16 : f32
    %16 = vector.broadcast %cst_8 : f32 to vector<8x1xf32>
    %17 = arith.maximumf %11, %16 : vector<8x1xf32>
    %18 = math.rsqrt %17 : vector<8x1xf32>
    %19 = arith.mulf %15, %18 : vector<8x1xf32>
    %20 = math.absf %19 : vector<8x1xf32>
    %cst_9 = arith.constant 1.000000e+00 : f32
    %21 = vector.broadcast %cst_9 : f32 to vector<8x1xf32>
    %22 = arith.subf %21, %20 : vector<8x1xf32>
    %23 = arith.mulf %2, %22 : vector<8x1xf32>
    %cst_10 = arith.constant 1.000000e+00 : f32
    %24 = vector.broadcast %cst_10 : f32 to vector<8x1xf32>
    %25 = arith.subf %24, %2 : vector<8x1xf32>
    %26 = arith.mulf %25, %20 : vector<8x1xf32>
    %27 = arith.addf %23, %26 : vector<8x1xf32>
    %28 = vector.shape_cast %27 : vector<8x1xf32> to vector<1x8x1xf32>
    %cst_11 = arith.constant dense<0.000000e+00> : vector<1xf32>
    %29 = vector.multi_reduction <add>, %28, %cst_11 [1, 2] : vector<1x8x1xf32> to vector<1xf32>
    %30 = vector.shape_cast %29 : vector<1xf32> to vector<1x1x1xf32>
    %31 = vector.extract %30[0, 0, 0] : f32 from vector<1x1x1xf32>
    %32 = vector.broadcast %31 : f32 to vector<1x8x128xf32>
    %c0_12 = arith.constant 0 : index
    %c0_13 = arith.constant 0 : index
    %c0_14 = arith.constant 0 : index
    %33 = vector.load %arg4[%c0_12, %c0_13, %c0_14] : memref<1x8x128xf32, #tpu.memory_space<vmem>>, vector<1x8x128xf32>
    tpu.vector_store %arg4[%c0_12, %c0_13, %c0_14], %32 {strides = array<i32>} : memref<1x8x128xf32, #tpu.memory_space<vmem>>, vector<1x8x128xf32>,
    return
  }
  func.func @transform_0(%arg0: i32) -> (i32, i32) {
    %c0_i32 = arith.constant 0 : i32
    %c0_i32_0 = arith.constant 0 : i32
    return %arg0, %c0_i32 : i32, i32
  }
  func.func @transform_1(%arg0: i32) -> (i32, i32) {
    %c0_i32 = arith.constant 0 : i32
    %c0_i32_0 = arith.constant 0 : i32
    return %arg0, %c0_i32 : i32, i32
  }
  func.func @transform_2(%arg0: i32) -> (i32, i32) {
    %c0_i32 = arith.constant 0 : i32
    %c0_i32_0 = arith.constant 0 : i32
    return %arg0, %c0_i32 : i32, i32
  }
  func.func @transform_3(%arg0: i32) -> (i32, i32, i32) {
    %c0_i32 = arith.constant 0 : i32
    %c0_i32_0 = arith.constant 0 : i32
    %c0_i32_1 = arith.constant 0 : i32
    return %arg0, %c0_i32, %c0_i32_0 : i32, i32, i32
  }
}

</mosaic_0001>

<llo_original>
// kernel: tpu_custom_call.1
$region0: #{tpu_custom_call.1}
  #allocation0 [shape = 'u32[]', space=smem, size = 0x4, offset = 0x4, fixed_abs, tag = 'smem constant byte address 0x4 - core index']
  #allocation1 [shape = 'u32[144,128]{1,0:T(1,128)}', space=vmem, size = 0x12000, scoped, tag = 'internal scratch']
  %s0 = inlined_call_operand.vmem [shape: f32[8,32], index: 0, kind: input, shape index: {}]
  %s1 = inlined_call_operand.hbm [shape: f32[8,32], index: 1, kind: input, shape index: {}]
  %s2 = inlined_call_operand.vmem [shape: f32[8,1], index: 2, kind: input, shape index: {}]
  %s3 = inlined_call_operand.hbm [shape: f32[1,8,128], index: 3, kind: output, shape index: {}]
  %s4 = sld [smem:[#allocation0]]
  $region26: #{tpu_custom_call.1} parent=0
    _
  %s6 = ssub.s32 1, %s4
  %s7 = scalar_select 0, %s6, %s4
  $region1: #{tpu_custom_call.1} parent=0
    #allocation2 [shape = 'u8[4096]{0}', space=vmem, size = 0x1000, scoped, tag = 'input window, operand 1, single buffered']
    #allocation3 [shape = 's32[1]{0}', space=sflag, size = 0x4, scoped, tag = 'scoped memory for tpu_custom_call.1']
    #allocation4 [shape = 's32[1]{0}', space=sflag, size = 0x4, scoped, tag = 'scoped memory for tpu_custom_call.1']
    #allocation5 [shape = 'u8[4096]{0}', space=vmem, size = 0x1000, scoped, tag = 'output window, operand 0, single buffered']
    %8 = vsyncpa [#allocation3], 0
    %9 = vsyncpa [#allocation4], 0
    // Predicated region
    $region2: #{tpu_custom_call.1} parent=1 // pred_check
      _
    $region3: #{tpu_custom_call.1} parent=1 // pred_check_branch
      %11 = sbr.rel (0) target = $region5
    $region4: #{tpu_custom_call.1} parent=1 // pred_region
      _
    $region5: #{tpu_custom_call.1} parent=1 // pred_fallthru
      _
    // Predicated region
    $region6: #{tpu_custom_call.1} parent=1 // pred_check
      _
    $region7: #{tpu_custom_call.1} parent=1 // pred_check_branch
      %13 = sbr.rel (0) target = $region9
    $region8: #{tpu_custom_call.1} parent=1 // pred_region
      %s15 = ssub.s32 128, 128
      %16 = vsyncadd [#allocation3], %s15
      %s18 = sshll.u32 [#allocation2], 4
      %s19 = int_to_ptr.vmem [resolvable:$true] %s18
      %21 = dma.hbm_to_vmem [thread:$0]  %s1, 128, %s19, [#allocation3]
    $region9: #{tpu_custom_call.1} parent=1 // pred_fallthru
      _
    // Predicated region
    $region10: #{tpu_custom_call.1} parent=1 // pred_check
      _
    $region11: #{tpu_custom_call.1} parent=1 // pred_check_branch
      %23 = sbr.rel (0) target = $region13
    $region12: #{tpu_custom_call.1} parent=1 // pred_region
      _
    $region13: #{tpu_custom_call.1} parent=1 // pred_fallthru
      _
    // Predicated region
    $region14: #{tpu_custom_call.1} parent=1 // pred_check
      _
    $region15: #{tpu_custom_call.1} parent=1 // pred_check_branch
      %25 = sbr.rel (0) target = $region17
    $region16: #{tpu_custom_call.1} parent=1 // pred_region
      %26 = dma.done [#allocation3], 128
    $region17: #{tpu_custom_call.1} parent=1 // pred_fallthru
      _
    %v27 = vld [vmem:[%s0] sm:$0xff]
    %v28 = vld [vmem:[#allocation2] sm:$0xff]
    %v29 = vld [vmem:[%s2] sm:$0xff]
    %v30 = vmul.f32 %v27, %v28
    %vm31 = vcmask 261120
    %v32 = vsel %vm31, %v30, 0.0
    %33 = vadd.xlane.f32.xlu0 %v32
    %v34 = vpop.xlane.xlu0 %33
    %v35 = vmul.f32 %v27, %v27
    %v36 = vsel %vm31, %v35, 0.0
    %37 = vadd.xlane.f32.xlu0 %v36
    %v38 = vpop.xlane.xlu0 %37
    %v39 = vmul.f32 %v28, %v28
    %v40 = vsel %vm31, %v39, 0.0
    %41 = vadd.xlane.f32.xlu0 %v40
    %v42 = vpop.xlane.xlu0 %41
    %v43 = vmax.f32 %v38, 1e-16
    %v44 = vrsqrt.pop %v43
    %v45 = vmul.f32 %v34, %v44
    %v46 = vmax.f32 %v42, 1e-16
    %v47 = vrsqrt.pop %v46
    %v48 = vmul.f32 %v45, %v47
    %v49 = vand.u32 2147483647, %v48
    %v50 = vsub.f32 1.0, %v49
    %v51 = vmul.f32 %v29, %v50
    %v52 = vsub.f32 1.0, %v29
    %v53 = vmul.f32 %v52, %v49
    %v54 = vadd.f32 %v51, %v53
    %vm55 = vcmask 7168
    %v56 = vsel %vm55, %v54, 0.0
    %57 = vadd.xlane.f32.xlu0 %v56
    %v58 = vpop.xlane.xlu0 %57
    %v59 = vrot.slane %v58, 4
    %v60 = vadd.f32 %v58, %v59
    %v61 = vrot.slane %v60, 2
    %v62 = vadd.f32 %v60, %v61
    %v63 = vrot.slane %v62, 1
    %v64 = vadd.f32 %v62, %v63
    %s65 = vtos %v64
    %v66 = vstv %s65
    %67 = vst [vmem:[#allocation5] sm:$0xff] %v66
    // Predicated region
    $region18: #{tpu_custom_call.1} parent=1 // pred_check
      _
    $region19: #{tpu_custom_call.1} parent=1 // pred_check_branch
      %69 = sbr.rel (0) target = $region21
    $region20: #{tpu_custom_call.1} parent=1 // pred_region
      %s71 = ssub.s32 128, 128
      %72 = vsyncadd [#allocation4], %s71
      %s74 = sshll.u32 [#allocation5], 4
      %s75 = int_to_ptr.vmem [resolvable:$true] %s74
      %77 = dma.vmem_to_hbm [thread:$0]  %s75, 128, %s3, [#allocation4]
    $region21: #{tpu_custom_call.1} parent=1 // pred_fallthru
      _
    // Predicated region
    $region22: #{tpu_custom_call.1} parent=1 // pred_check
      _
    $region23: #{tpu_custom_call.1} parent=1 // pred_check_branch
      %79 = sbr.rel (0) target = $region25
    $region24: #{tpu_custom_call.1} parent=1 // pred_region
      %80 = dma.done [#allocation4], 128
    $region25: #{tpu_custom_call.1} parent=1 // pred_fallthru
      _
    %81 = vsyncpa [#allocation3], 1
    %82 = vsyncpa [#allocation4], 1

</llo_original>
